<compile_context>
chip_gen: v6e
topology: v6e:2x2x1
jax: 0.10.0
libtpu: 0.0.40
codegen_flags: <defaults>
</compile_context>

<pallas_src>
import functools

import jax
import jax.numpy as jnp
from jax.experimental import pallas as pl
from jax.experimental.pallas import tpu as pltpu

LANE = 128             # TPU lane width: final layer lane-padded to this
BATCH_BLOCK_MAX = 512  # max rows per batch tile in the gridded path (mult. of 8)
GRID_THRESHOLD = 512   # at/below this batch, a single gridless call is cheaper


def actor_kernel(x_ref, w1_ref, b1_ref, w2_ref, b2_ref, w3_ref, b3_ref, o_ref):
    """Fused 3-layer MLP forward for one batch tile.

    Weights are bf16 (native MXU dtype, half the HBM traffic); matmul operands
    are cast to bf16 while accumulation (preferred_element_type), bias-add,
    ReLU and tanh remain f32.  Output tile is (TB, 128) lane-dense and stored
    as bf16 (tanh output is in [-1, 1], ~3 decimal digits kept).
    """
    x = x_ref[...]

    # fc1 + ReLU
    h1 = jnp.dot(x.astype(jnp.bfloat16), w1_ref[...],
                 preferred_element_type=jnp.float32) + b1_ref[...]
    h1 = jnp.maximum(h1, 0.0)

    # fc2 + ReLU
    h2 = jnp.dot(h1.astype(jnp.bfloat16), w2_ref[...],
                 preferred_element_type=jnp.float32) + b2_ref[...]
    h2 = jnp.maximum(h2, 0.0)

    # output layer (lane-padded to 128) + tanh, stored bf16
    out = jnp.dot(h2.astype(jnp.bfloat16), w3_ref[...],
                  preferred_element_type=jnp.float32) + b3_ref[...]
    o_ref[...] = jnp.tanh(out).astype(o_ref.dtype)


def _cost_estimate(batch, input_dim, fc1, fc2):
    flops = 2 * batch * (input_dim * fc1 + fc1 * fc2 + fc2 * LANE)
    transcendentals = batch * LANE  # tanh
    bytes_accessed = (
        4 * batch * input_dim                                   # x (f32)
        + 2 * (input_dim * fc1 + fc1 * fc2 + fc2 * LANE)        # bf16 weights
        + 4 * (fc1 + fc2 + LANE)                                # f32 biases
        + 2 * batch * LANE                                      # bf16 output
    )
    return pl.CostEstimate(flops=flops, transcendentals=transcendentals,
                           bytes_accessed=bytes_accessed)


def _batch_block(batch):
    """Batch tile for the gridded path: <= 512 rows, >= 2 grid steps (v7x)."""
    half = (batch // 2) // 128 * 128
    return max(128, min(BATCH_BLOCK_MAX, half))


@functools.partial(jax.jit, static_argnames=("n_actions",))
def actor_forward(x, prepared, *, n_actions):
    """x: (batch, input_dim) f32.  prepared: output of prepare_actor_params."""
    batch, input_dim = x.shape
    w1, b1 = prepared["w1"], prepared["b1"]
    w2, b2 = prepared["w2"], prepared["b2"]
    w3, b3 = prepared["w3"], prepared["b3"]
    fc1 = w1.shape[1]
    fc2 = w2.shape[1]

    if batch <= GRID_THRESHOLD:
        # Small batch: whole problem fits in VMEM; single gridless invocation.
        out = pl.pallas_call(
            actor_kernel,
            out_shape=jax.ShapeDtypeStruct((batch, LANE), jnp.bfloat16),
            in_specs=[pl.BlockSpec(memory_space=pltpu.MemorySpace.VMEM)] * 7,
            out_specs=pl.BlockSpec(memory_space=pltpu.MemorySpace.VMEM),
            cost_estimate=_cost_estimate(batch, input_dim, fc1, fc2),
        )(x, w1, b1, w2, b2, w3, b3)
    else:
        # Large batch: big batch tiles (<=512 rows), pipelined by BlockSpec and
        # marked "parallel" so v7x's two TensorCores both get work.  Ragged
        # last block handled by Pallas (partial output stores are masked), so
        # no jnp.pad / slice passes over HBM.
        tb = _batch_block(batch)
        out = pl.pallas_call(
            actor_kernel,
            out_shape=jax.ShapeDtypeStruct((batch, LANE), jnp.bfloat16),
            grid_spec=pltpu.PrefetchScalarGridSpec(
                num_scalar_prefetch=0,
                grid=(pl.cdiv(batch, tb),),
                in_specs=[
                    pl.BlockSpec((tb, input_dim), lambda i: (i, 0)),
                    pl.BlockSpec((input_dim, fc1), lambda i: (0, 0)),
                    pl.BlockSpec((1, fc1), lambda i: (0, 0)),
                    pl.BlockSpec((fc1, fc2), lambda i: (0, 0)),
                    pl.BlockSpec((1, fc2), lambda i: (0, 0)),
                    pl.BlockSpec((fc2, LANE), lambda i: (0, 0)),
                    pl.BlockSpec((1, LANE), lambda i: (0, 0)),
                ],
                out_specs=pl.BlockSpec((tb, LANE), lambda i: (i, 0)),
            ),
            compiler_params=pltpu.CompilerParams(
                dimension_semantics=("parallel",)),
            cost_estimate=_cost_estimate(batch, input_dim, fc1, fc2),
        )(x, w1, b1, w2, b2, w3, b3)

    # TODO(synk): consumers that can read the lane-padded (batch, 128) bf16
    # output directly should skip this slice + f32 cast (saves an output pass).
    return out[:, :n_actions].astype(jnp.float32)


def prepare_actor_params(params):
    """One-time weight prep (done outside the per-call path):
    bf16 weights, f32 biases, output layer lane-padded to 128 columns."""
    fc2, n_actions = params["w3"].shape
    w3p = jnp.zeros((fc2, LANE), jnp.bfloat16).at[:, :n_actions].set(
        params["w3"].astype(jnp.bfloat16))
    b3p = jnp.zeros((1, LANE), jnp.float32).at[:, :n_actions].set(params["b3"])
    prepared = {
        "w1": params["w1"].astype(jnp.bfloat16),
        "b1": params["b1"].astype(jnp.float32),
        "w2": params["w2"].astype(jnp.bfloat16),
        "b2": params["b2"].astype(jnp.float32),
        "w3": w3p,
        "b3": b3p,
    }
    return prepared, n_actions


def init_actor_params(key, input_dim, fc1_dims=256, fc2_dims=128, n_actions=2):
    """PyTorch nn.Linear-style init: U(-1/sqrt(fan_in), +1/sqrt(fan_in)).
    Weights stored pre-transposed to (in, out); biases as (1, out)."""
    def linear(k, fan_in, fan_out):
        kw, kb = jax.random.split(k)
        bound = 1.0 / jnp.sqrt(fan_in)
        w = jax.random.uniform(kw, (fan_in, fan_out), jnp.float32, -bound, bound)
        b = jax.random.uniform(kb, (1, fan_out), jnp.float32, -bound, bound)
        return w, b

    k1, k2, k3 = jax.random.split(key, 3)
    w1, b1 = linear(k1, input_dim, fc1_dims)
    w2, b2 = linear(k2, fc1_dims, fc2_dims)
    w3, b3 = linear(k3, fc2_dims, n_actions)
    return {"w1": w1, "b1": b1, "w2": w2, "b2": b2, "w3": w3, "b3": b3}


def actor_forward_ref_bf16(x, p):
    """Reference mirroring the kernel's bf16-operand / f32-accumulate matmuls."""
    def mm(a, w):
        return jnp.dot(a.astype(jnp.bfloat16), w.astype(jnp.bfloat16),
                       preferred_element_type=jnp.float32)
    h1 = jnp.maximum(mm(x, p["w1"]) + p["b1"], 0.0)
    h2 = jnp.maximum(mm(h1, p["w2"]) + p["b2"], 0.0)
    return jnp.tanh(mm(h2, p["w3"]) + p["b3"])


def actor_forward_ref_f32(x, p):
    """Pure f32 reference of the original PyTorch forward."""
    h1 = jnp.maximum(x @ p["w1"] + p["b1"], 0.0)
    h2 = jnp.maximum(h1 @ p["w2"] + p["b2"], 0.0)
    return jnp.tanh(h2 @ p["w3"] + p["b3"])


if __name__ == "__main__":
    # TODO(synk): optimizer / checkpoint save-load from the PyTorch module are
    # host-side concerns and are not part of the forward kernel.
    key = jax.random.PRNGKey(0)
    k_x1, k_x2, k_p = jax.random.split(key, 3)

    input_dim = 32                                # input_dims=(32,)
    fc1_dims, fc2_dims, n_actions = 256, 128, 2   # module defaults
    params = init_actor_params(k_p, input_dim, fc1_dims, fc2_dims, n_actions)
    prepared, n_act = prepare_actor_params(params)

    # Path 1: small batch -> gridless single-block kernel.
    x_small = jax.random.normal(k_x1, (8, input_dim), jnp.float32)
    out_small = jax.block_until_ready(actor_forward(x_small, prepared,
                                                    n_actions=n_act))
    assert out_small.shape == (8, n_actions), out_small.shape
    assert jnp.all(jnp.isfinite(out_small))
    assert jnp.allclose(out_small, actor_forward_ref_bf16(x_small, params),
                        atol=1e-2, rtol=1e-2), "small-batch mismatch (bf16 ref)"
    assert jnp.allclose(out_small, actor_forward_ref_f32(x_small, params),
                        atol=5e-2, rtol=5e-2), "small-batch mismatch (f32 ref)"

    # Path 2: larger batch -> batch-tiled parallel grid with a ragged last
    # block (1000 is not a multiple of the tile size).
    x_big = jax.random.normal(k_x2, (1000, input_dim), jnp.float32)
    out_big = jax.block_until_ready(actor_forward(x_big, prepared,
                                                  n_actions=n_act))
    assert out_big.shape == (1000, n_actions), out_big.shape
    assert jnp.all(jnp.isfinite(out_big))
    assert jnp.allclose(out_big, actor_forward_ref_bf16(x_big, params),
                        atol=1e-2, rtol=1e-2), "big-batch mismatch (bf16 ref)"
    assert jnp.allclose(out_big, actor_forward_ref_f32(x_big, params),
                        atol=5e-2, rtol=5e-2), "big-batch mismatch (f32 ref)"

    print("KERNEL_OK")
</pallas_src>

<mosaic_0001>
module attributes {stable_mosaic.version = 11 : i64} {
  func.func @actor_kernel(%arg0: memref<8x32xf32, #tpu.memory_space<vmem>>, %arg1: memref<32x256xbf16, #tpu.memory_space<vmem>>, %arg2: memref<1x256xf32, #tpu.memory_space<vmem>>, %arg3: memref<256x128xbf16, #tpu.memory_space<vmem>>, %arg4: memref<1x128xf32, #tpu.memory_space<vmem>>, %arg5: memref<128x128xbf16, #tpu.memory_space<vmem>>, %arg6: memref<1x128xf32, #tpu.memory_space<vmem>>, %arg7: memref<8x128xbf16, #tpu.memory_space<vmem>>) attributes {dimension_semantics = [], scalar_prefetch = 0 : i64, scratch_operands = 0 : i64, tpu.core_type = #tpu.core_type<tc>} {
    %c0 = arith.constant 0 : index
    %c0_0 = arith.constant 0 : index
    %0 = vector.load %arg0[%c0, %c0_0] : memref<8x32xf32, #tpu.memory_space<vmem>>, vector<8x32xf32>
    %1 = arith.truncf %0 : vector<8x32xf32> to vector<8x32xbf16>
    %c0_1 = arith.constant 0 : index
    %c0_2 = arith.constant 0 : index
    %2 = vector.load %arg1[%c0_1, %c0_2] : memref<32x256xbf16, #tpu.memory_space<vmem>>, vector<32x256xbf16>
    %cst = arith.constant dense<0.000000e+00> : vector<8x256xf32>
    %3 = tpu.matmul %1, %2, %cst {dimension_numbers = #tpu.dot_dimension_numbers<[1], [0], [0], [1], [0, 0, 1, 1], [], []>} : vector<8x32xbf16>, vector<32x256xbf16>, vector<8x256xf32> -> vector<8x256xf32>
    %c0_3 = arith.constant 0 : index
    %c0_4 = arith.constant 0 : index
    %4 = vector.load %arg2[%c0_3, %c0_4] : memref<1x256xf32, #tpu.memory_space<vmem>>, vector<1x256xf32>
    %5 = vector.broadcast %4 : vector<1x256xf32> to vector<8x256xf32>
    %6 = arith.addf %3, %5 : vector<8x256xf32>
    %cst_5 = arith.constant 0.000000e+00 : f32
    %7 = vector.broadcast %cst_5 : f32 to vector<8x256xf32>
    %8 = arith.maximumf %6, %7 : vector<8x256xf32>
    %9 = arith.truncf %8 : vector<8x256xf32> to vector<8x256xbf16>
    %c0_6 = arith.constant 0 : index
    %c0_7 = arith.constant 0 : index
    %10 = vector.load %arg3[%c0_6, %c0_7] : memref<256x128xbf16, #tpu.memory_space<vmem>>, vector<256x128xbf16>
    %cst_8 = arith.constant dense<0.000000e+00> : vector<8x128xf32>
    %11 = tpu.matmul %9, %10, %cst_8 {dimension_numbers = #tpu.dot_dimension_numbers<[1], [0], [0], [1], [0, 0, 1, 1], [], []>} : vector<8x256xbf16>, vector<256x128xbf16>, vector<8x128xf32> -> vector<8x128xf32>
    %c0_9 = arith.constant 0 : index
    %c0_10 = arith.constant 0 : index
    %12 = vector.load %arg4[%c0_9, %c0_10] : memref<1x128xf32, #tpu.memory_space<vmem>>, vector<1x128xf32>
    %13 = vector.broadcast %12 : vector<1x128xf32> to vector<8x128xf32>
    %14 = arith.addf %11, %13 : vector<8x128xf32>
    %cst_11 = arith.constant 0.000000e+00 : f32
    %15 = vector.broadcast %cst_11 : f32 to vector<8x128xf32>
    %16 = arith.maximumf %14, %15 : vector<8x128xf32>
    %17 = arith.truncf %16 : vector<8x128xf32> to vector<8x128xbf16>
    %c0_12 = arith.constant 0 : index
    %c0_13 = arith.constant 0 : index
    %18 = vector.load %arg5[%c0_12, %c0_13] : memref<128x128xbf16, #tpu.memory_space<vmem>>, vector<128x128xbf16>
    %cst_14 = arith.constant dense<0.000000e+00> : vector<8x128xf32>
    %19 = tpu.matmul %17, %18, %cst_14 {dimension_numbers = #tpu.dot_dimension_numbers<[1], [0], [0], [1], [0, 0, 1, 1], [], []>} : vector<8x128xbf16>, vector<128x128xbf16>, vector<8x128xf32> -> vector<8x128xf32>
    %c0_15 = arith.constant 0 : index
    %c0_16 = arith.constant 0 : index
    %20 = vector.load %arg6[%c0_15, %c0_16] : memref<1x128xf32, #tpu.memory_space<vmem>>, vector<1x128xf32>
    %21 = vector.broadcast %20 : vector<1x128xf32> to vector<8x128xf32>
    %22 = arith.addf %19, %21 : vector<8x128xf32>
    %23 = math.tanh %22 : vector<8x128xf32>
    %24 = arith.truncf %23 : vector<8x128xf32> to vector<8x128xbf16>
    %c0_17 = arith.constant 0 : index
    %c0_18 = arith.constant 0 : index
    %25 = vector.load %arg7[%c0_17, %c0_18] : memref<8x128xbf16, #tpu.memory_space<vmem>>, vector<8x128xbf16>
    tpu.vector_store %arg7[%c0_17, %c0_18], %24 {strides = array<i32>} : memref<8x128xbf16, #tpu.memory_space<vmem>>, vector<8x128xbf16>,
    return
  }
}

</mosaic_0001>

<llo_original>
// kernel: actor_forward.1
$region0: #{actor_forward.1}
  #allocation0 [shape = 'u32[]', space=smem, size = 0x4, offset = 0x4, fixed_abs, tag = 'smem constant byte address 0x4 - core index']
  #allocation1 [shape = 'u32[144,128]{1,0:T(1,128)}', space=vmem, size = 0x12000, scoped, tag = 'internal scratch']
  %s0 = inlined_call_operand.hbm [shape: f32[8,32], index: 0, kind: input, shape index: {}]
  %s1 = inlined_call_operand.hbm [shape: bf16[32,256], index: 1, kind: input, shape index: {}]
  %s2 = inlined_call_operand.hbm [shape: f32[1,256], index: 2, kind: input, shape index: {}]
  %s3 = inlined_call_operand.hbm [shape: bf16[256,128], index: 3, kind: input, shape index: {}]
  %s4 = inlined_call_operand.vmem [shape: f32[1,128], index: 4, kind: input, shape index: {}]
  %s5 = inlined_call_operand.hbm [shape: bf16[128,128], index: 5, kind: input, shape index: {}]
  %s6 = inlined_call_operand.vmem [shape: f32[1,128], index: 6, kind: input, shape index: {}]
  %s7 = inlined_call_operand.vmem [shape: bf16[8,128], index: 7, kind: output, shape index: {}]
  %s8 = sld [smem:[#allocation0]]
  $region58: #{actor_forward.1} parent=0
    _
  %s10 = ssub.s32 1, %s8
  %s11 = scalar_select 0, %s10, %s8
  $region1: #{actor_forward.1} parent=0
    #allocation2 [shape = 'u8[4096]{0}', space=vmem, size = 0x1000, scoped, tag = 'input window, operand 0, single buffered']
    #allocation3 [shape = 's32[1]{0}', space=sflag, size = 0x4, scoped, tag = 'scoped memory for actor_forward.1']
    #allocation4 [shape = 'u8[16384]{0}', space=vmem, size = 0x4000, scoped, tag = 'input window, operand 1, single buffered']
    #allocation5 [shape = 's32[1]{0}', space=sflag, size = 0x4, scoped, tag = 'scoped memory for actor_forward.1']
    #allocation6 [shape = 'u8[1024]{0}', space=vmem, size = 0x400, scoped, tag = 'input window, operand 2, single buffered']
    #allocation7 [shape = 'u8[65536]{0}', space=vmem, size = 0x10000, scoped, tag = 'input window, operand 3, single buffered']
    #allocation8 [shape = 's32[1]{0}', space=sflag, size = 0x4, scoped, tag = 'scoped memory for actor_forward.1']
    #allocation9 [shape = 'u8[32768]{0}', space=vmem, size = 0x8000, scoped, tag = 'input window, operand 5, single buffered']
    %12 = vsyncpa [#allocation3], 0
    %13 = vsyncpa [#allocation5], 0
    %14 = vsyncpa [#allocation8], 0
    // Predicated region
    $region2: #{actor_forward.1} parent=1 // pred_check
      _
    $region3: #{actor_forward.1} parent=1 // pred_check_branch
      %16 = sbr.rel (0) target = $region5
    $region4: #{actor_forward.1} parent=1 // pred_region
      %s18 = ssub.s32 128, 128
      %19 = vsyncadd [#allocation3], %s18
      %s21 = sshll.u32 [#allocation2], 4
      %s22 = int_to_ptr.vmem [resolvable:$true] %s21
      %24 = dma.hbm_to_vmem [thread:$0]  %s0, 128, %s22, [#allocation3]
    $region5: #{actor_forward.1} parent=1 // pred_fallthru
      _
    // Predicated region
    $region6: #{actor_forward.1} parent=1 // pred_check
      _
    $region7: #{actor_forward.1} parent=1 // pred_check_branch
      %26 = sbr.rel (0) target = $region9
    $region8: #{actor_forward.1} parent=1 // pred_region
      %s28 = ssub.s32 512, 512
      %29 = vsyncadd [#allocation5], %s28
      %s30 = sshll.u32 [#allocation4], 4
      %s31 = int_to_ptr.vmem [resolvable:$true] %s30
      %36 = dma.hbm_to_vmem [thread:$0]  %s1, 512, %s31, [#allocation5], 128, 128, 8
    $region9: #{actor_forward.1} parent=1 // pred_fallthru
      _
    // Predicated region
    $region10: #{actor_forward.1} parent=1 // pred_check
      _
    $region11: #{actor_forward.1} parent=1 // pred_check_branch
      %38 = sbr.rel (0) target = $region13
    $region12: #{actor_forward.1} parent=1 // pred_region
      %s40 = ssub.s32 32, 32
      %41 = vsyncadd [#allocation5], %s40
      %s43 = sshll.u32 [#allocation6], 4
      %s44 = int_to_ptr.vmem [resolvable:$true] %s43
      %46 = dma.hbm_to_vmem [thread:$0]  %s2, 32, %s44, [#allocation5]
    $region13: #{actor_forward.1} parent=1 // pred_fallthru
      _
    // Predicated region
    $region14: #{actor_forward.1} parent=1 // pred_check
      _
    $region15: #{actor_forward.1} parent=1 // pred_check_branch
      %48 = sbr.rel (0) target = $region17
    $region16: #{actor_forward.1} parent=1 // pred_region
      %s50 = ssub.s32 2048, 2048
      %51 = vsyncadd [#allocation8], %s50
      %s52 = sshll.u32 [#allocation7], 4
      %s53 = int_to_ptr.vmem [resolvable:$true] %s52
      %58 = dma.hbm_to_vmem [thread:$0]  %s3, 2048, %s53, [#allocation8], 64, 64, 4
    $region17: #{actor_forward.1} parent=1 // pred_fallthru
      _
    // Predicated region
    $region18: #{actor_forward.1} parent=1 // pred_check
      _
    $region19: #{actor_forward.1} parent=1 // pred_check_branch
      %60 = sbr.rel (0) target = $region21
    $region20: #{actor_forward.1} parent=1 // pred_region
      _
    $region21: #{actor_forward.1} parent=1 // pred_fallthru
      _
    // Predicated region
    $region22: #{actor_forward.1} parent=1 // pred_check
      _
    $region23: #{actor_forward.1} parent=1 // pred_check_branch
      %62 = sbr.rel (0) target = $region25
    $region24: #{actor_forward.1} parent=1 // pred_region
      %s64 = ssub.s32 1024, 1024
      %65 = vsyncadd [#allocation8], %s64
      %s66 = sshll.u32 [#allocation9], 4
      %s67 = int_to_ptr.vmem [resolvable:$true] %s66
      %72 = dma.hbm_to_vmem [thread:$0]  %s5, 1024, %s67, [#allocation8], 64, 64, 4
    $region25: #{actor_forward.1} parent=1 // pred_fallthru
      _
    // Predicated region
    $region26: #{actor_forward.1} parent=1 // pred_check
      _
    $region27: #{actor_forward.1} parent=1 // pred_check_branch
      %74 = sbr.rel (0) target = $region29
    $region28: #{actor_forward.1} parent=1 // pred_region
      _
    $region29: #{actor_forward.1} parent=1 // pred_fallthru
      _
    // Predicated region
    $region30: #{actor_forward.1} parent=1 // pred_check
      _
    $region31: #{actor_forward.1} parent=1 // pred_check_branch
      %76 = sbr.rel (0) target = $region33
    $region32: #{actor_forward.1} parent=1 // pred_region
      %77 = dma.done [#allocation3], 128
    $region33: #{actor_forward.1} parent=1 // pred_fallthru
      _
    // Predicated region
    $region34: #{actor_forward.1} parent=1 // pred_check
      _
    $region35: #{actor_forward.1} parent=1 // pred_check_branch
      %79 = sbr.rel (0) target = $region37
    $region36: #{actor_forward.1} parent=1 // pred_region
      %80 = dma.done [#allocation5], 512
    $region37: #{actor_forward.1} parent=1 // pred_fallthru
      _
    // Predicated region
    $region38: #{actor_forward.1} parent=1 // pred_check
      _
    $region39: #{actor_forward.1} parent=1 // pred_check_branch
      %82 = sbr.rel (0) target = $region41
    $region40: #{actor_forward.1} parent=1 // pred_region
      %83 = dma.done [#allocation5], 32
    $region41: #{actor_forward.1} parent=1 // pred_fallthru
      _
    // Predicated region
    $region42: #{actor_forward.1} parent=1 // pred_check
      _
    $region43: #{actor_forward.1} parent=1 // pred_check_branch
      %85 = sbr.rel (0) target = $region45
    $region44: #{actor_forward.1} parent=1 // pred_region
      %86 = dma.done [#allocation8], 2048
    $region45: #{actor_forward.1} parent=1 // pred_fallthru
      _
    // Predicated region
    $region46: #{actor_forward.1} parent=1 // pred_check
      _
    $region47: #{actor_forward.1} parent=1 // pred_check_branch
      %88 = sbr.rel (0) target = $region49
    $region48: #{actor_forward.1} parent=1 // pred_region
      %89 = dma.done [#allocation8], 1024
    $region49: #{actor_forward.1} parent=1 // pred_fallthru
      _
    %v91 = vld [vmem:[#allocation2] sm:$0xff]
    %v92 = vpack.c.bf16 %v91, %v91
    %v93 = vld [vmem:[#allocation4] sm:$0xff]
    %v94 = vld [vmem:[#allocation4 + $0x8] sm:$0xff]
    %v95 = vld [vmem:[#allocation4 + $0x10] sm:$0xff]
    %v96 = vld [vmem:[#allocation4 + $0x18] sm:$0xff]
    %v97 = vld [vmem:[#allocation6] sm:$0x3]
    %v99 = vlaneseq
    %v100 = vshrl.u32 %v99, 7
    %v101 = vsub.s32 0, %v100
    %v102 = vrot.slane %v97, %v101
    %v103 = vlaneseq
    %v104 = vshrl.u32 %v103, 7
    %v105 = vsub.s32 1, %v104
    %v106 = vrot.slane %v97, %v105
    %v113 = vunpack.c.l.b16 %v93
    %v114 = vunpack.c.h.b16 %v93
    %v115 = vunpack.c.l.b16 %v94
    %v116 = vunpack.c.h.b16 %v94
    %v117 = vunpack.c.l.b16 %v95
    %v118 = vunpack.c.h.b16 %v95
    %v119 = vunpack.c.l.b16 %v96
    %v120 = vunpack.c.h.b16 %v96
    %v121 = vpack.c.b16 %v115, %v113
    %v122 = vpack.c.b16 %v116, %v114
    %v123 = vpack.c.b16 %v119, %v117
    %v124 = vpack.c.b16 %v120, %v118
    %vm129 = vcmask 261120
    %v131 = vsel %vm129, %v92, 0
    %133 = vmatprep.subr.bf16.mxu0 0
    %134 = vmatpush1.bf16.msra.mxu0 0
    %135 = vmatprep.subr.bf16.mxu0 0
    %136 = vmatpush1.bf16.msra.mxu0 0
    %137 = vmatprep.subr.bf16.mxu0 0
    %138 = vmatpush1.bf16.msra.mxu0 0
    %139 = vmatprep.subr.bf16.mxu0 0
    %140 = vmatpush1.bf16.msra.mxu0 0
    %141 = vmatprep.subr.bf16.mxu0 0
    %142 = vmatpush1.bf16.msra.mxu0 0
    %143 = vmatprep.subr.bf16.mxu0 0
    %144 = vmatpush1.bf16.msra.mxu0 0
    %145 = vmatprep.subr.bf16.mxu0 %v124
    %146 = vmatpush1.bf16.msra.mxu0 %v123
    %147 = vmatprep.subr.bf16.mxu0 %v122
    %148 = vmatpush1.bf16.msra.mxu0 %v121
    %149 = vmatprep.subr.bf16.mxu0 0
    %150 = vmatpush2.bf16.msra.mxu0 0
    %151 = vmatprep.subr.bf16.mxu0 0
    %152 = vmatpush2.bf16.msra.mxu0 0
    %153 = vmatprep.subr.bf16.mxu0 0
    %154 = vmatpush2.bf16.msra.mxu0 0
    %155 = vmatprep.subr.bf16.mxu0 0
    %156 = vmatpush2.bf16.msra.mxu0 0
    %157 = vmatprep.subr.bf16.mxu0 0
    %158 = vmatpush2.bf16.msra.mxu0 0
    %159 = vmatprep.subr.bf16.mxu0 0
    %160 = vmatpush2.bf16.msra.mxu0 0
    %161 = vmatprep.subr.bf16.mxu0 0
    %162 = vmatpush2.bf16.msra.mxu0 0
    %163 = vmatprep.subr.bf16.mxu0 0
    %164 = vmatpush2.bf16.msra.mxu0 0
    %165 = vmatprep.mubr.bf16.mxu0 0
    %166 = vmatmul.mubr.bf16.gmra.mxu0 %v131
    %v167 = vpop.f32.mrf.mxu0
    %v168 = vadd.f32 %v102, %v167
    %v169 = vpop.f32.mrf.mxu0
    %v170 = vadd.f32 %v106, %v169
    %v171 = vpop.f32.mrf.mxu0
    %v172 = vpop.f32.mrf.mxu0
    %173 = vdwg.mxu0
    %v174 = vmax.f32 %v168, 0.0
    %v175 = vmax.f32 %v170, 0.0
    %v176 = vpack.c.bf16 %v174, %v174
    %v177 = vpack.c.bf16 %v175, %v175
    %v178 = vld [vmem:[#allocation7] sm:$0xf]
    %v179 = vld [vmem:[#allocation7 + $0x4] sm:$0xf]
    %v180 = vld [vmem:[#allocation7 + $0x8] sm:$0xf]
    %v181 = vld [vmem:[#allocation7 + $0xc] sm:$0xf]
    %v182 = vld [vmem:[#allocation7 + $0x10] sm:$0xf]
    %v183 = vld [vmem:[#allocation7 + $0x14] sm:$0xf]
    %v184 = vld [vmem:[#allocation7 + $0x18] sm:$0xf]
    %v185 = vld [vmem:[#allocation7 + $0x1c] sm:$0xf]
    %v186 = vld [vmem:[#allocation7 + $0x20] sm:$0xf]
    %v187 = vld [vmem:[#allocation7 + $0x24] sm:$0xf]
    %v188 = vld [vmem:[#allocation7 + $0x28] sm:$0xf]
    %v189 = vld [vmem:[#allocation7 + $0x2c] sm:$0xf]
    %v190 = vld [vmem:[#allocation7 + $0x30] sm:$0xf]
    %v191 = vld [vmem:[#allocation7 + $0x34] sm:$0xf]
    %v192 = vld [vmem:[#allocation7 + $0x38] sm:$0xf]
    %v193 = vld [vmem:[#allocation7 + $0x3c] sm:$0xf]
    %v194 = vld [vmem:[#allocation7 + $0x40] sm:$0xf]
    %v195 = vld [vmem:[#allocation7 + $0x44] sm:$0xf]
    %v196 = vld [vmem:[#allocation7 + $0x48] sm:$0xf]
    %v197 = vld [vmem:[#allocation7 + $0x4c] sm:$0xf]
    %v198 = vld [vmem:[#allocation7 + $0x50] sm:$0xf]
    %v199 = vld [vmem:[#allocation7 + $0x54] sm:$0xf]
    %v200 = vld [vmem:[#allocation7 + $0x58] sm:$0xf]
    %v201 = vld [vmem:[#allocation7 + $0x5c] sm:$0xf]
    %v202 = vld [vmem:[#allocation7 + $0x60] sm:$0xf]
    %v203 = vld [vmem:[#allocation7 + $0x64] sm:$0xf]
    %v204 = vld [vmem:[#allocation7 + $0x68] sm:$0xf]
    %v205 = vld [vmem:[#allocation7 + $0x6c] sm:$0xf]
    %v206 = vld [vmem:[#allocation7 + $0x70] sm:$0xf]
    %v207 = vld [vmem:[#allocation7 + $0x74] sm:$0xf]
    %v208 = vld [vmem:[#allocation7 + $0x78] sm:$0xf]
    %v209 = vld [vmem:[#allocation7 + $0x7c] sm:$0xf]
    %v210 = vld [vmem:[%s4] sm:$0x1]
    %v212 = vlaneseq
    %v213 = vshrl.u32 %v212, 7
    %v214 = vsub.s32 0, %v213
    %v215 = vrot.slane %v210, %v214
    %v249 = vunpack.c.l.b16 %v178
    %v250 = vunpack.c.l.b16 %v179
    %v251 = vunpack.c.l.b16 %v180
    %v252 = vunpack.c.l.b16 %v181
    %v253 = vunpack.c.l.b16 %v182
    %v254 = vunpack.c.l.b16 %v183
    %v255 = vunpack.c.l.b16 %v184
    %v256 = vunpack.c.l.b16 %v185
    %v257 = vunpack.c.l.b16 %v186
    %v258 = vunpack.c.l.b16 %v187
    %v259 = vunpack.c.l.b16 %v188
    %v260 = vunpack.c.l.b16 %v189
    %v261 = vunpack.c.l.b16 %v190
    %v262 = vunpack.c.l.b16 %v191
    %v263 = vunpack.c.l.b16 %v192
    %v264 = vunpack.c.l.b16 %v193
    %v265 = vunpack.c.l.b16 %v194
    %v266 = vunpack.c.l.b16 %v195
    %v267 = vunpack.c.l.b16 %v196
    %v268 = vunpack.c.l.b16 %v197
    %v269 = vunpack.c.l.b16 %v198
    %v270 = vunpack.c.l.b16 %v199
    %v271 = vunpack.c.l.b16 %v200
    %v272 = vunpack.c.l.b16 %v201
    %v273 = vunpack.c.l.b16 %v202
    %v274 = vunpack.c.l.b16 %v203
    %v275 = vunpack.c.l.b16 %v204
    %v276 = vunpack.c.l.b16 %v205
    %v277 = vunpack.c.l.b16 %v206
    %v278 = vunpack.c.l.b16 %v207
    %v279 = vunpack.c.l.b16 %v208
    %v280 = vunpack.c.l.b16 %v209
    %v281 = vpack.c.b16 %v250, %v249
    %v282 = vpack.c.b16 %v252, %v251
    %v283 = vpack.c.b16 %v254, %v253
    %v284 = vpack.c.b16 %v256, %v255
    %v285 = vpack.c.b16 %v258, %v257
    %v286 = vpack.c.b16 %v260, %v259
    %v287 = vpack.c.b16 %v262, %v261
    %v288 = vpack.c.b16 %v264, %v263
    %v289 = vpack.c.b16 %v266, %v265
    %v290 = vpack.c.b16 %v268, %v267
    %v291 = vpack.c.b16 %v270, %v269
    %v292 = vpack.c.b16 %v272, %v271
    %v293 = vpack.c.b16 %v274, %v273
    %v294 = vpack.c.b16 %v276, %v275
    %v295 = vpack.c.b16 %v278, %v277
    %v296 = vpack.c.b16 %v280, %v279
    %313 = vmatprep.subr.bf16.mxu0 0
    %314 = vmatpush1.bf16.msra.mxu0 %v288
    %315 = vmatprep.subr.bf16.mxu0 0
    %316 = vmatpush1.bf16.msra.mxu0 %v287
    %317 = vmatprep.subr.bf16.mxu0 0
    %318 = vmatpush1.bf16.msra.mxu0 %v286
    %319 = vmatprep.subr.bf16.mxu0 0
    %320 = vmatpush1.bf16.msra.mxu0 %v285
    %321 = vmatprep.subr.bf16.mxu0 0
    %322 = vmatpush1.bf16.msra.mxu0 %v284
    %323 = vmatprep.subr.bf16.mxu0 0
    %324 = vmatpush1.bf16.msra.mxu0 %v283
    %325 = vmatprep.subr.bf16.mxu0 0
    %326 = vmatpush1.bf16.msra.mxu0 %v282
    %327 = vmatprep.subr.bf16.mxu0 0
    %328 = vmatpush1.bf16.msra.mxu0 %v281
    %329 = vmatprep.subr.bf16.mxu0 0
    %330 = vmatpush2.bf16.msra.mxu0 %v296
    %331 = vmatprep.subr.bf16.mxu0 0
    %332 = vmatpush2.bf16.msra.mxu0 %v295
    %333 = vmatprep.subr.bf16.mxu0 0
    %334 = vmatpush2.bf16.msra.mxu0 %v294
    %335 = vmatprep.subr.bf16.mxu0 0
    %336 = vmatpush2.bf16.msra.mxu0 %v293
    %337 = vmatprep.subr.bf16.mxu0 0
    %338 = vmatpush2.bf16.msra.mxu0 %v292
    %339 = vmatprep.subr.bf16.mxu0 0
    %340 = vmatpush2.bf16.msra.mxu0 %v291
    %341 = vmatprep.subr.bf16.mxu0 0
    %342 = vmatpush2.bf16.msra.mxu0 %v290
    %343 = vmatprep.subr.bf16.mxu0 0
    %344 = vmatpush2.bf16.msra.mxu0 %v289
    %345 = vmatprep.mubr.bf16.mxu0 %v177
    %346 = vmatmul.mubr.bf16.gmra.mxu0 %v176
    %v347 = vpop.f32.mrf.mxu0
    %v348 = vadd.f32 %v215, %v347
    %v349 = vpop.f32.mrf.mxu0
    %v350 = vpop.f32.mrf.mxu0
    %v351 = vpop.f32.mrf.mxu0
    %352 = vdwg.mxu0
    %v353 = vmax.f32 %v348, 0.0
    %v354 = vpack.c.bf16 %v353, %v353
    %v355 = vld [vmem:[#allocation9] sm:$0xf]
    %v356 = vld [vmem:[#allocation9 + $0x4] sm:$0xf]
    %v357 = vld [vmem:[#allocation9 + $0x8] sm:$0xf]
    %v358 = vld [vmem:[#allocation9 + $0xc] sm:$0xf]
    %v359 = vld [vmem:[#allocation9 + $0x10] sm:$0xf]
    %v360 = vld [vmem:[#allocation9 + $0x14] sm:$0xf]
    %v361 = vld [vmem:[#allocation9 + $0x18] sm:$0xf]
    %v362 = vld [vmem:[#allocation9 + $0x1c] sm:$0xf]
    %v363 = vld [vmem:[#allocation9 + $0x20] sm:$0xf]
    %v364 = vld [vmem:[#allocation9 + $0x24] sm:$0xf]
    %v365 = vld [vmem:[#allocation9 + $0x28] sm:$0xf]
    %v366 = vld [vmem:[#allocation9 + $0x2c] sm:$0xf]
    %v367 = vld [vmem:[#allocation9 + $0x30] sm:$0xf]
    %v368 = vld [vmem:[#allocation9 + $0x34] sm:$0xf]
    %v369 = vld [vmem:[#allocation9 + $0x38] sm:$0xf]
    %v370 = vld [vmem:[#allocation9 + $0x3c] sm:$0xf]
    %v371 = vld [vmem:[%s6] sm:$0x1]
    %v373 = vlaneseq
    %v374 = vshrl.u32 %v373, 7
    %v375 = vsub.s32 0, %v374
    %v376 = vrot.slane %v371, %v375
    %v394 = vunpack.c.l.b16 %v355
    %v395 = vunpack.c.l.b16 %v356
    %v396 = vunpack.c.l.b16 %v357
    %v397 = vunpack.c.l.b16 %v358
    %v398 = vunpack.c.l.b16 %v359
    %v399 = vunpack.c.l.b16 %v360
    %v400 = vunpack.c.l.b16 %v361
    %v401 = vunpack.c.l.b16 %v362
    %v402 = vunpack.c.l.b16 %v363
    %v403 = vunpack.c.l.b16 %v364
    %v404 = vunpack.c.l.b16 %v365
    %v405 = vunpack.c.l.b16 %v366
    %v406 = vunpack.c.l.b16 %v367
    %v407 = vunpack.c.l.b16 %v368
    %v408 = vunpack.c.l.b16 %v369
    %v409 = vunpack.c.l.b16 %v370
    %v410 = vpack.c.b16 %v395, %v394
    %v411 = vpack.c.b16 %v397, %v396
    %v412 = vpack.c.b16 %v399, %v398
    %v413 = vpack.c.b16 %v401, %v400
    %v414 = vpack.c.b16 %v403, %v402
    %v415 = vpack.c.b16 %v405, %v404
    %v416 = vpack.c.b16 %v407, %v406
    %v417 = vpack.c.b16 %v409, %v408
    %426 = vmatprep.subr.bf16.mxu0 0
    %427 = vmatpush1.bf16.msra.mxu0 %v417
    %428 = vmatprep.subr.bf16.mxu0 0
    %429 = vmatpush1.bf16.msra.mxu0 %v416
    %430 = vmatprep.subr.bf16.mxu0 0
    %431 = vmatpush1.bf16.msra.mxu0 %v415
    %432 = vmatprep.subr.bf16.mxu0 0
    %433 = vmatpush1.bf16.msra.mxu0 %v414
    %434 = vmatprep.subr.bf16.mxu0 0
    %435 = vmatpush1.bf16.msra.mxu0 %v413
    %436 = vmatprep.subr.bf16.mxu0 0
    %437 = vmatpush1.bf16.msra.mxu0 %v412
    %438 = vmatprep.subr.bf16.mxu0 0
    %439 = vmatpush1.bf16.msra.mxu0 %v411
    %440 = vmatprep.subr.bf16.mxu0 0
    %441 = vmatpush1.bf16.msra.mxu0 %v410
    %442 = vmatprep.subr.bf16.mxu0 0
    %443 = vmatpush2.bf16.msra.mxu0 0
    %444 = vmatprep.subr.bf16.mxu0 0
    %445 = vmatpush2.bf16.msra.mxu0 0
    %446 = vmatprep.subr.bf16.mxu0 0
    %447 = vmatpush2.bf16.msra.mxu0 0
    %448 = vmatprep.subr.bf16.mxu0 0
    %449 = vmatpush2.bf16.msra.mxu0 0
    %450 = vmatprep.subr.bf16.mxu0 0
    %451 = vmatpush2.bf16.msra.mxu0 0
    %452 = vmatprep.subr.bf16.mxu0 0
    %453 = vmatpush2.bf16.msra.mxu0 0
    %454 = vmatprep.subr.bf16.mxu0 0
    %455 = vmatpush2.bf16.msra.mxu0 0
    %456 = vmatprep.subr.bf16.mxu0 0
    %457 = vmatpush2.bf16.msra.mxu0 0
    %458 = vmatprep.mubr.bf16.mxu0 0
    %459 = vmatmul.mubr.bf16.gmra.mxu0 %v354
    %v460 = vpop.f32.mrf.mxu0
    %v461 = vadd.f32 %v376, %v460
    %v462 = vpop.f32.mrf.mxu0
    %v463 = vpop.f32.mrf.mxu0
    %v464 = vpop.f32.mrf.mxu0
    %465 = vdwg.mxu0
    %v466 = vtanh.pop %v461
    %v467 = vpack.c.bf16 %v466, %v466
    %468 = vst [vmem:[%s7] sm:$0xf] %v467
    // Predicated region
    $region50: #{actor_forward.1} parent=1 // pred_check
      _
    $region51: #{actor_forward.1} parent=1 // pred_check_branch
      %470 = sbr.rel (0) target = $region53
    $region52: #{actor_forward.1} parent=1 // pred_region
      _
    $region53: #{actor_forward.1} parent=1 // pred_fallthru
      _
    // Predicated region
    $region54: #{actor_forward.1} parent=1 // pred_check
      _
    $region55: #{actor_forward.1} parent=1 // pred_check_branch
      %472 = sbr.rel (0) target = $region57
    $region56: #{actor_forward.1} parent=1 // pred_region
      _
    $region57: #{actor_forward.1} parent=1 // pred_fallthru
      _
    %473 = vsyncpa [#allocation3], 1
    %474 = vsyncpa [#allocation5], 1
    %475 = vsyncpa [#allocation8], 1

</llo_original>
